<compile_context>
chip_gen: v5e
topology: v5e:2x2
jax: 0.10.0
libtpu: 0.0.40
codegen_flags: <defaults>
</compile_context>

<pallas_src>
import jax
import jax.numpy as jnp
from jax.experimental import pallas as pl
from jax.experimental.pallas import tpu as pltpu

_H1 = 400   # logical fc1 width (PyTorch module)
_H2 = 256   # fc2 width (already lane-aligned)


def _round_up(x, m):
    return ((x + m - 1) // m) * m


def _actor_kernel(s_ref, ma_ref, w1_ref, b1_ref, w2_ref, b2_ref, w3_ref, b3_ref,
                  o_ref):
    cdt = w1_ref.dtype  # matmul operand dtype (bf16 default / f32 parity)
    # fc1 + ReLU  (MXU matmul, f32 accumulate; bias/ReLU in f32)
    a1 = jnp.dot(s_ref[...].astype(cdt), w1_ref[...],
                 preferred_element_type=jnp.float32)
    a1 = jnp.maximum(a1 + b1_ref[...], 0.0)
    # fc2 + ReLU
    a2 = jnp.dot(a1.astype(cdt), w2_ref[...],
                 preferred_element_type=jnp.float32)
    a2 = jnp.maximum(a2 + b2_ref[...], 0.0)
    # fc3 + tanh * max_action  (lane-dense padded output; padded lanes are 0)
    a3 = jnp.dot(a2.astype(cdt), w3_ref[...],
                 preferred_element_type=jnp.float32)
    max_action = ma_ref[0, 0]                      # scalar from SMEM
    o_ref[...] = (jnp.tanh(a3 + b3_ref[...]) * max_action).astype(o_ref.dtype)


def prepare_actor_params(params, compute_dtype=jnp.bfloat16):
    """One-time parameter prep (call once, outside the hot loop).

    - zero-pads fc1 width 400 -> 512 (padded hidden units are relu(0)=0 and
      their w2 rows are 0, so semantics are exactly preserved)
    - zero-pads fc3 output columns up to a multiple of 128 (lane-dense stores)
    - casts matmul-operand weights to `compute_dtype` (bf16 default); biases
      stay f32 since they are added to the f32 accumulators.
    """
    w1, b1, w2, b2, w3, b3 = params
    action_dim = int(w3.shape[1])

    h1p = _round_up(int(w1.shape[1]), 128)
    if h1p != w1.shape[1]:
        w1 = jnp.pad(w1, ((0, 0), (0, h1p - w1.shape[1])))
        b1 = jnp.pad(b1, ((0, 0), (0, h1p - b1.shape[1])))
        w2 = jnp.pad(w2, ((0, h1p - w2.shape[0]), (0, 0)))

    ap = _round_up(max(action_dim, 128), 128)
    if ap != action_dim:
        w3 = jnp.pad(w3, ((0, 0), (0, ap - action_dim)))
        b3 = jnp.pad(b3, ((0, 0), (0, ap - action_dim)))

    return {
        "w1": w1.astype(compute_dtype), "b1": b1.astype(jnp.float32),
        "w2": w2.astype(compute_dtype), "b2": b2.astype(jnp.float32),
        "w3": w3.astype(compute_dtype), "b3": b3.astype(jnp.float32),
        "action_dim": action_dim,
    }


def actor_forward(state, prepared, max_action, *, block_b=None):
    """state: [B, state_dim] f32 -> [B, action_dim] f32.

    `prepared` comes from prepare_actor_params. `block_b` is a sweepable batch
    tile; by default 512 rows, halved (down to 128) to keep >= 2 grid steps.
    """
    w1, b1 = prepared["w1"], prepared["b1"]
    w2, b2 = prepared["w2"], prepared["b2"]
    w3, b3 = prepared["w3"], prepared["b3"]
    action_dim = prepared["action_dim"]

    B, state_dim = state.shape
    h1 = w1.shape[1]
    h2 = w2.shape[1]
    ap = w3.shape[1]

    # --- batch tiling ---------------------------------------------------------
    if block_b is None:
        block_b = 512                      # ~85%+ of roofline per tiling data
        while block_b > 128 and B <= block_b:
            block_b //= 2                  # keep >= 2 grid steps (v7x: 2 TCs)
        if B <= block_b:
            block_b = B                    # small batch: one full-extent block
    else:
        if block_b >= 128:
            block_b = _round_up(block_b, 128)   # clean 128-row MXU passes (v5e)
        elif block_b < B:
            block_b = _round_up(block_b, 8)
        else:
            block_b = B
    grid = (pl.cdiv(B, block_b),)          # ragged final block handled by Pallas

    ma = jnp.asarray(max_action, jnp.float32).reshape(1, 1)   # SMEM scalar

    const = lambda i: (0, 0)               # weights/biases stay VMEM-resident
    in_specs = [
        pl.BlockSpec((block_b, state_dim), lambda i: (i, 0)),        # state tile
        pl.BlockSpec(memory_space=pltpu.MemorySpace.SMEM),           # max_action
        pl.BlockSpec((state_dim, h1), const),                        # w1
        pl.BlockSpec((1, h1), const),                                # b1
        pl.BlockSpec((h1, h2), const),                               # w2
        pl.BlockSpec((1, h2), const),                                # b2
        pl.BlockSpec((h2, ap), const),                               # w3
        pl.BlockSpec((1, ap), const),                                # b3
    ]
    out_specs = pl.BlockSpec((block_b, ap), lambda i: (i, 0))

    flops = 2 * B * (state_dim * h1 + h1 * h2 + h2 * ap)
    bytes_accessed = (state.size * state.dtype.itemsize
                      + sum(int(a.size) * a.dtype.itemsize
                            for a in (w1, w2, w3, b1, b2, b3))
                      + B * ap * 4)
    cost = pl.CostEstimate(flops=int(flops),
                           transcendentals=int(B * ap),
                           bytes_accessed=int(bytes_accessed))

    out = pl.pallas_call(
        _actor_kernel,
        out_shape=jax.ShapeDtypeStruct((B, ap), jnp.float32),
        grid=grid,
        in_specs=in_specs,
        out_specs=out_specs,
        compiler_params=pltpu.CompilerParams(
            dimension_semantics=(pltpu.PARALLEL,)),
        cost_estimate=cost,
    )(state, ma, w1, b1, w2, b2, w3, b3)

    # TODO(synk): on v7x, confirm in the Mosaic dump that the PARALLEL batch
    # axis is actually sharded across both TensorCores; if not, switch to an
    # explicit pl.core_map over pltpu.create_tensorcore_mesh.
    return out[:, :action_dim]             # drop lane-padding columns


def init_actor_params(key, state_dim, action_dim):
    """PyTorch-style uniform(-1/sqrt(fan_in), 1/sqrt(fan_in)) init.

    Weights are returned already transposed to [in, out]; biases kept 2-D
    ([1, out]) so they stay lane-aligned.
    """
    dims = [(state_dim, _H1), (_H1, _H2), (_H2, action_dim)]
    params = []
    for fan_in, fan_out in dims:
        key, kw, kb = jax.random.split(key, 3)
        bound = 1.0 / jnp.sqrt(jnp.float32(fan_in))
        w = jax.random.uniform(kw, (fan_in, fan_out), jnp.float32, -bound, bound)
        b = jax.random.uniform(kb, (1, fan_out), jnp.float32, -bound, bound)
        params.extend([w, b])
    return tuple(params)


def actor_reference(state, params, max_action):
    """Pure-JAX reference (unpadded, f32) for correctness checking."""
    w1, b1, w2, b2, w3, b3 = params
    a = jnp.maximum(state @ w1 + b1, 0.0)
    a = jnp.maximum(a @ w2 + b2, 0.0)
    return jnp.tanh(a @ w3 + b3) * max_action


if __name__ == "__main__":
    key = jax.random.PRNGKey(0)

    batch = 2
    state_dim = 8
    action_dim = 4
    max_action = 2.0

    key, k_params, k_state = jax.random.split(key, 3)
    raw_params = init_actor_params(k_params, state_dim, action_dim)
    state = jax.random.normal(k_state, (batch, state_dim), jnp.float32)
    ref = actor_reference(state, raw_params, max_action)

    # f32-operand parity path (matches the PyTorch forward semantics closely).
    prep_f32 = prepare_actor_params(raw_params, compute_dtype=jnp.float32)
    out = jax.block_until_ready(actor_forward(state, prep_f32, max_action))
    assert out.shape == (batch, action_dim)
    assert jnp.allclose(out, ref, atol=1e-5, rtol=1e-5), "f32 mismatch vs reference"

    # Default bf16-operand path (MXU-native on v5e/v6e/v7x, f32 accumulation).
    prep_bf16 = prepare_actor_params(raw_params)   # compute_dtype=bf16 default
    out_bf16 = jax.block_until_ready(actor_forward(state, prep_bf16, max_action))
    assert jnp.allclose(out_bf16, ref, atol=2e-2, rtol=2e-2), "bf16 mismatch vs reference"

    # Larger, non-tile-multiple batch: exercises the multi-step grid with a
    # ragged final block and no wrapper-side batch padding.
    key, k_big = jax.random.split(key)
    big_state = jax.random.normal(k_big, (300, state_dim), jnp.float32)
    out_big = jax.block_until_ready(actor_forward(big_state, prep_f32, max_action))
    ref_big = actor_reference(big_state, raw_params, max_action)
    assert out_big.shape == (300, action_dim)
    assert jnp.allclose(out_big, ref_big, atol=1e-5, rtol=1e-5), "tiled mismatch vs reference"

    print("KERNEL_OK")
</pallas_src>

<mosaic_0001>
module attributes {stable_mosaic.version = 11 : i64} {
  func.func @_actor_kernel(%arg0: i32, %arg1: memref<2x8xf32, #tpu.memory_space<vmem>>, %arg2: memref<1x1xf32, #tpu.memory_space<smem>>, %arg3: memref<8x512xf32, #tpu.memory_space<vmem>>, %arg4: memref<1x512xf32, #tpu.memory_space<vmem>>, %arg5: memref<512x256xf32, #tpu.memory_space<vmem>>, %arg6: memref<1x256xf32, #tpu.memory_space<vmem>>, %arg7: memref<256x128xf32, #tpu.memory_space<vmem>>, %arg8: memref<1x128xf32, #tpu.memory_space<vmem>>, %arg9: memref<2x128xf32, #tpu.memory_space<vmem>>) attributes {dimension_semantics = [#tpu.dimension_semantics<parallel>], iteration_bounds = array<i64: 1>, scalar_prefetch = 0 : i64, scratch_operands = 0 : i64, tpu.core_type = #tpu.core_type<tc>, window_params = [{transform_indices = @transform_0, window_bounds = array<i64: 2, 8>}, {transform_indices = @transform_1, window_bounds = array<i64: 1, 1>}, {pipeline_mode = #tpu.pipeline_mode<synchronous>, transform_indices = @transform_2, window_bounds = array<i64: 8, 512>}, {pipeline_mode = #tpu.pipeline_mode<synchronous>, transform_indices = @transform_3, window_bounds = array<i64: 1, 512>}, {pipeline_mode = #tpu.pipeline_mode<synchronous>, transform_indices = @transform_4, window_bounds = array<i64: 512, 256>}, {pipeline_mode = #tpu.pipeline_mode<synchronous>, transform_indices = @transform_5, window_bounds = array<i64: 1, 256>}, {pipeline_mode = #tpu.pipeline_mode<synchronous>, transform_indices = @transform_6, window_bounds = array<i64: 256, 128>}, {pipeline_mode = #tpu.pipeline_mode<synchronous>, transform_indices = @transform_7, window_bounds = array<i64: 1, 128>}, {transform_indices = @transform_8, window_bounds = array<i64: 2, 128>}]} {
    %c0 = arith.constant 0 : index
    %c0_0 = arith.constant 0 : index
    %0 = vector.load %arg1[%c0, %c0_0] : memref<2x8xf32, #tpu.memory_space<vmem>>, vector<2x8xf32>
    %c0_1 = arith.constant 0 : index
    %c0_2 = arith.constant 0 : index
    %1 = vector.load %arg3[%c0_1, %c0_2] : memref<8x512xf32, #tpu.memory_space<vmem>>, vector<8x512xf32>
    %cst = arith.constant dense<0.000000e+00> : vector<2x512xf32>
    %2 = tpu.matmul %0, %1, %cst {dimension_numbers = #tpu.dot_dimension_numbers<[1], [0], [0], [1], [0, 0, 1, 1], [], []>} : vector<2x8xf32>, vector<8x512xf32>, vector<2x512xf32> -> vector<2x512xf32>
    %c0_3 = arith.constant 0 : index
    %c0_4 = arith.constant 0 : index
    %3 = vector.load %arg4[%c0_3, %c0_4] : memref<1x512xf32, #tpu.memory_space<vmem>>, vector<1x512xf32>
    %4 = vector.broadcast %3 : vector<1x512xf32> to vector<2x512xf32>
    %5 = arith.addf %2, %4 : vector<2x512xf32>
    %cst_5 = arith.constant 0.000000e+00 : f32
    %6 = vector.broadcast %cst_5 : f32 to vector<2x512xf32>
    %7 = arith.maximumf %5, %6 : vector<2x512xf32>
    %c0_6 = arith.constant 0 : index
    %c0_7 = arith.constant 0 : index
    %8 = vector.load %arg5[%c0_6, %c0_7] : memref<512x256xf32, #tpu.memory_space<vmem>>, vector<512x256xf32>
    %cst_8 = arith.constant dense<0.000000e+00> : vector<2x256xf32>
    %9 = tpu.matmul %7, %8, %cst_8 {dimension_numbers = #tpu.dot_dimension_numbers<[1], [0], [0], [1], [0, 0, 1, 1], [], []>} : vector<2x512xf32>, vector<512x256xf32>, vector<2x256xf32> -> vector<2x256xf32>
    %c0_9 = arith.constant 0 : index
    %c0_10 = arith.constant 0 : index
    %10 = vector.load %arg6[%c0_9, %c0_10] : memref<1x256xf32, #tpu.memory_space<vmem>>, vector<1x256xf32>
    %11 = vector.broadcast %10 : vector<1x256xf32> to vector<2x256xf32>
    %12 = arith.addf %9, %11 : vector<2x256xf32>
    %cst_11 = arith.constant 0.000000e+00 : f32
    %13 = vector.broadcast %cst_11 : f32 to vector<2x256xf32>
    %14 = arith.maximumf %12, %13 : vector<2x256xf32>
    %c0_12 = arith.constant 0 : index
    %c0_13 = arith.constant 0 : index
    %15 = vector.load %arg7[%c0_12, %c0_13] : memref<256x128xf32, #tpu.memory_space<vmem>>, vector<256x128xf32>
    %cst_14 = arith.constant dense<0.000000e+00> : vector<2x128xf32>
    %16 = tpu.matmul %14, %15, %cst_14 {dimension_numbers = #tpu.dot_dimension_numbers<[1], [0], [0], [1], [0, 0, 1, 1], [], []>} : vector<2x256xf32>, vector<256x128xf32>, vector<2x128xf32> -> vector<2x128xf32>
    %c0_15 = arith.constant 0 : index
    %c0_16 = arith.constant 0 : index
    %17 = memref.load %arg2[%c0_15, %c0_16] : memref<1x1xf32, #tpu.memory_space<smem>>
    %c0_17 = arith.constant 0 : index
    %c0_18 = arith.constant 0 : index
    %18 = vector.load %arg8[%c0_17, %c0_18] : memref<1x128xf32, #tpu.memory_space<vmem>>, vector<1x128xf32>
    %19 = vector.broadcast %18 : vector<1x128xf32> to vector<2x128xf32>
    %20 = arith.addf %16, %19 : vector<2x128xf32>
    %21 = math.tanh %20 : vector<2x128xf32>
    %22 = vector.broadcast %17 : f32 to vector<2x128xf32>
    %23 = arith.mulf %21, %22 : vector<2x128xf32>
    %c0_19 = arith.constant 0 : index
    %c0_20 = arith.constant 0 : index
    %24 = vector.load %arg9[%c0_19, %c0_20] : memref<2x128xf32, #tpu.memory_space<vmem>>, vector<2x128xf32>
    tpu.vector_store %arg9[%c0_19, %c0_20], %23 {strides = array<i32>} : memref<2x128xf32, #tpu.memory_space<vmem>>, vector<2x128xf32>,
    return
  }
  func.func @transform_0(%arg0: i32) -> (i32, i32) {
    %c0_i32 = arith.constant 0 : i32
    %c0_i32_0 = arith.constant 0 : i32
    return %arg0, %c0_i32 : i32, i32
  }
  func.func @transform_1(%arg0: i32) -> (i32, i32) {
    %c0_i32 = arith.constant 0 : i32
    %c0_i32_0 = arith.constant 0 : i32
    %c0_i32_1 = arith.constant 0 : i32
    return %c0_i32, %c0_i32_0 : i32, i32
  }
  func.func @transform_2(%arg0: i32) -> (i32, i32) {
    %c0_i32 = arith.constant 0 : i32
    %c0_i32_0 = arith.constant 0 : i32
    %c0_i32_1 = arith.constant 0 : i32
    return %c0_i32, %c0_i32_0 : i32, i32
  }
  func.func @transform_3(%arg0: i32) -> (i32, i32) {
    %c0_i32 = arith.constant 0 : i32
    %c0_i32_0 = arith.constant 0 : i32
    %c0_i32_1 = arith.constant 0 : i32
    return %c0_i32, %c0_i32_0 : i32, i32
  }
  func.func @transform_4(%arg0: i32) -> (i32, i32) {
    %c0_i32 = arith.constant 0 : i32
    %c0_i32_0 = arith.constant 0 : i32
    %c0_i32_1 = arith.constant 0 : i32
    return %c0_i32, %c0_i32_0 : i32, i32
  }
  func.func @transform_5(%arg0: i32) -> (i32, i32) {
    %c0_i32 = arith.constant 0 : i32
    %c0_i32_0 = arith.constant 0 : i32
    %c0_i32_1 = arith.constant 0 : i32
    return %c0_i32, %c0_i32_0 : i32, i32
  }
  func.func @transform_6(%arg0: i32) -> (i32, i32) {
    %c0_i32 = arith.constant 0 : i32
    %c0_i32_0 = arith.constant 0 : i32
    %c0_i32_1 = arith.constant 0 : i32
    return %c0_i32, %c0_i32_0 : i32, i32
  }
  func.func @transform_7(%arg0: i32) -> (i32, i32) {
    %c0_i32 = arith.constant 0 : i32
    %c0_i32_0 = arith.constant 0 : i32
    %c0_i32_1 = arith.constant 0 : i32
    return %c0_i32, %c0_i32_0 : i32, i32
  }
  func.func @transform_8(%arg0: i32) -> (i32, i32) {
    %c0_i32 = arith.constant 0 : i32
    %c0_i32_0 = arith.constant 0 : i32
    return %arg0, %c0_i32 : i32, i32
  }
}

</mosaic_0001>

<llo_original>
// kernel: tpu_custom_call.1
$region0: #{tpu_custom_call.1}
  #allocation0 [shape = 'u32[]', space=smem, size = 0x4, offset = 0x4, fixed_abs, tag = 'smem constant byte address 0x4 - core index']
  #allocation1 [shape = 'u32[72,128]{1,0:T(1,128)}', space=vmem, size = 0x9000, scoped, tag = 'internal scratch']
  #allocation2 [shape = 'f32[1,1]{1,0:T(1,128)S(6)}', space=smem, size = 0x200, scoped, tag = 'scoped memory for tpu_custom_call.1']
  %s0 = inlined_call_operand.vmem [shape: f32[2,8], index: 0, kind: input, shape index: {}]
  %s1 = inlined_call_operand.<no memory space> [shape: f32[1,1], index: 1, kind: input, shape index: {}]
  %s2 = inlined_call_operand.hbm [shape: f32[8,512], index: 2, kind: input, shape index: {}]
  %s3 = inlined_call_operand.hbm [shape: f32[1,512], index: 3, kind: input, shape index: {}]
  %s4 = inlined_call_operand.hbm [shape: f32[512,256], index: 4, kind: input, shape index: {}]
  %s5 = inlined_call_operand.vmem [shape: f32[1,256], index: 5, kind: input, shape index: {}]
  %s6 = inlined_call_operand.hbm [shape: f32[256,128], index: 6, kind: input, shape index: {}]
  %s7 = inlined_call_operand.vmem [shape: f32[1,128], index: 7, kind: input, shape index: {}]
  %s8 = inlined_call_operand.hbm [shape: f32[2,128], index: 8, kind: output, shape index: {}]
  %s9 = sld [smem:[#allocation0]]
  $region58: #{tpu_custom_call.1} parent=0
    _
  %s11 = ssub.s32 1, %s9
  %s12 = scalar_select 0, %s11, %s9
  %13 = sst [smem:[#allocation2]] %s1
  $region1: #{tpu_custom_call.1} parent=0
    #allocation3 [shape = 'u8[16384]{0}', space=vmem, size = 0x4000, scoped, tag = 'input window, operand 2, single buffered']
    #allocation4 [shape = 's32[1]{0}', space=sflag, size = 0x4, scoped, tag = 'scoped memory for tpu_custom_call.1']
    #allocation5 [shape = 's32[1]{0}', space=sflag, size = 0x4, scoped, tag = 'scoped memory for tpu_custom_call.1']
    #allocation6 [shape = 'u8[2048]{0}', space=vmem, size = 0x800, scoped, tag = 'input window, operand 3, single buffered']
    #allocation7 [shape = 's32[1]{0}', space=sflag, size = 0x4, scoped, tag = 'scoped memory for tpu_custom_call.1']
    #allocation8 [shape = 'u8[524288]{0}', space=vmem, size = 0x80000, scoped, tag = 'input window, operand 4, single buffered']
    #allocation9 [shape = 'u8[131072]{0}', space=vmem, size = 0x20000, scoped, tag = 'input window, operand 6, single buffered']
    #allocation10 [shape = 's32[1]{0}', space=sflag, size = 0x4, scoped, tag = 'scoped memory for tpu_custom_call.1']
    #allocation11 [shape = 'u8[1024]{0}', space=vmem, size = 0x400, scoped, tag = 'output window, operand 0, single buffered']
    %14 = vsyncpa [#allocation4], 0
    %15 = vsyncpa [#allocation7], 0
    %16 = vsyncpa [#allocation10], 0
    %17 = vsyncpa [#allocation5], 0
    // Predicated region
    $region2: #{tpu_custom_call.1} parent=1 // pred_check
      _
    $region3: #{tpu_custom_call.1} parent=1 // pred_check_branch
      %19 = sbr.rel (0) target = $region5
    $region4: #{tpu_custom_call.1} parent=1 // pred_region
      _
    $region5: #{tpu_custom_call.1} parent=1 // pred_fallthru
      _
    // Predicated region
    $region6: #{tpu_custom_call.1} parent=1 // pred_check
      _
    $region7: #{tpu_custom_call.1} parent=1 // pred_check_branch
      %21 = sbr.rel (0) target = $region9
    $region8: #{tpu_custom_call.1} parent=1 // pred_region
      _
    $region9: #{tpu_custom_call.1} parent=1 // pred_fallthru
      _
    // Predicated region
    $region10: #{tpu_custom_call.1} parent=1 // pred_check
      _
    $region11: #{tpu_custom_call.1} parent=1 // pred_check_branch
      %23 = sbr.rel (0) target = $region13
    $region12: #{tpu_custom_call.1} parent=1 // pred_region
      %25 = vsyncadd [#allocation4], 0
      %s27 = sshll.u32 %s2, 4
      %s28 = int_to_ptr.hbm [resolvable:$true] %s27
      %s29 = sshll.u32 [#allocation3], 4
      %s30 = int_to_ptr.vmem [resolvable:$true] %s29
      %32 = dma.hbm_to_vmem [thread:$0]  %s28, 512, %s30, [#allocation4]
    $region13: #{tpu_custom_call.1} parent=1 // pred_fallthru
      _
    // Predicated region
    $region14: #{tpu_custom_call.1} parent=1 // pred_check
      _
    $region15: #{tpu_custom_call.1} parent=1 // pred_check_branch
      %34 = sbr.rel (0) target = $region17
    $region16: #{tpu_custom_call.1} parent=1 // pred_region
      %36 = vsyncadd [#allocation7], 0
      %s38 = sshll.u32 %s3, 4
      %s39 = int_to_ptr.hbm [resolvable:$true] %s38
      %s40 = sshll.u32 [#allocation6], 4
      %s41 = int_to_ptr.vmem [resolvable:$true] %s40
      %43 = dma.hbm_to_vmem [thread:$0]  %s39, 64, %s41, [#allocation7]
    $region17: #{tpu_custom_call.1} parent=1 // pred_fallthru
      _
    // Predicated region
    $region18: #{tpu_custom_call.1} parent=1 // pred_check
      _
    $region19: #{tpu_custom_call.1} parent=1 // pred_check_branch
      %45 = sbr.rel (0) target = $region21
    $region20: #{tpu_custom_call.1} parent=1 // pred_region
      %47 = vsyncadd [#allocation7], 0
      %s48 = sshll.u32 %s4, 4
      %s49 = int_to_ptr.hbm [resolvable:$true] %s48
      %s50 = sshll.u32 [#allocation8], 4
      %s51 = int_to_ptr.vmem [resolvable:$true] %s50
      %56 = dma.hbm_to_vmem [thread:$0]  %s49, 16384, %s51, [#allocation7], 256, 256, 16
    $region21: #{tpu_custom_call.1} parent=1 // pred_fallthru
      _
    // Predicated region
    $region22: #{tpu_custom_call.1} parent=1 // pred_check
      _
    $region23: #{tpu_custom_call.1} parent=1 // pred_check_branch
      %58 = sbr.rel (0) target = $region25
    $region24: #{tpu_custom_call.1} parent=1 // pred_region
      _
    $region25: #{tpu_custom_call.1} parent=1 // pred_fallthru
      _
    // Predicated region
    $region26: #{tpu_custom_call.1} parent=1 // pred_check
      _
    $region27: #{tpu_custom_call.1} parent=1 // pred_check_branch
      %60 = sbr.rel (0) target = $region29
    $region28: #{tpu_custom_call.1} parent=1 // pred_region
      %62 = vsyncadd [#allocation10], 0
      %s63 = sshll.u32 %s6, 4
      %s64 = int_to_ptr.hbm [resolvable:$true] %s63
      %s65 = sshll.u32 [#allocation9], 4
      %s66 = int_to_ptr.vmem [resolvable:$true] %s65
      %71 = dma.hbm_to_vmem [thread:$0]  %s64, 4096, %s66, [#allocation10], 128, 128, 8
    $region29: #{tpu_custom_call.1} parent=1 // pred_fallthru
      _
    // Predicated region
    $region30: #{tpu_custom_call.1} parent=1 // pred_check
      _
    $region31: #{tpu_custom_call.1} parent=1 // pred_check_branch
      %73 = sbr.rel (0) target = $region33
    $region32: #{tpu_custom_call.1} parent=1 // pred_region
      _
    $region33: #{tpu_custom_call.1} parent=1 // pred_fallthru
      _
    // Predicated region
    $region34: #{tpu_custom_call.1} parent=1 // pred_check
      _
    $region35: #{tpu_custom_call.1} parent=1 // pred_check_branch
      %75 = sbr.rel (0) target = $region37
    $region36: #{tpu_custom_call.1} parent=1 // pred_region
      %77 = dma.done [#allocation4], 512
    $region37: #{tpu_custom_call.1} parent=1 // pred_fallthru
      _
    // Predicated region
    $region38: #{tpu_custom_call.1} parent=1 // pred_check
      _
    $region39: #{tpu_custom_call.1} parent=1 // pred_check_branch
      %79 = sbr.rel (0) target = $region41
    $region40: #{tpu_custom_call.1} parent=1 // pred_region
      %81 = dma.done [#allocation7], 64
    $region41: #{tpu_custom_call.1} parent=1 // pred_fallthru
      _
    // Predicated region
    $region42: #{tpu_custom_call.1} parent=1 // pred_check
      _
    $region43: #{tpu_custom_call.1} parent=1 // pred_check_branch
      %83 = sbr.rel (0) target = $region45
    $region44: #{tpu_custom_call.1} parent=1 // pred_region
      %85 = dma.done [#allocation7], 16384
    $region45: #{tpu_custom_call.1} parent=1 // pred_fallthru
      _
    // Predicated region
    $region46: #{tpu_custom_call.1} parent=1 // pred_check
      _
    $region47: #{tpu_custom_call.1} parent=1 // pred_check_branch
      %87 = sbr.rel (0) target = $region49
    $region48: #{tpu_custom_call.1} parent=1 // pred_region
      %89 = dma.done [#allocation10], 4096
    $region49: #{tpu_custom_call.1} parent=1 // pred_fallthru
      _
    %v90 = vld [vmem:[%s0] sm:$0x3]
    %v91 = vld [vmem:[#allocation3] sm:$0xff]
    %v92 = vld [vmem:[#allocation3 + $0x8] sm:$0xff]
    %v93 = vld [vmem:[#allocation3 + $0x10] sm:$0xff]
    %v94 = vld [vmem:[#allocation3 + $0x18] sm:$0xff]
    %v95 = vld [vmem:[#allocation6] sm:$0xf]
    %v97 = vperm.slane %v95, 0
    %v98 = vperm.slane %v95, 1
    %v99 = vperm.slane %v95, 2
    %v100 = vperm.slane %v95, 3
    %vm105 = vcmask 64512
    %v107 = vsel %vm105, %v90, 0
    %109 = vmatpush.msra.mxu0 0.0
    %110 = vmatpush.msra.mxu0 0.0
    %111 = vmatpush.msra.mxu0 0.0
    %112 = vmatpush.msra.mxu0 0.0
    %113 = vmatpush.msra.mxu0 0.0
    %114 = vmatpush.msra.mxu0 0.0
    %115 = vmatpush.msra.mxu0 0.0
    %116 = vmatpush.msra.mxu0 0.0
    %117 = vmatpush.msra.mxu0 0.0
    %118 = vmatpush.msra.mxu0 0.0
    %119 = vmatpush.msra.mxu0 0.0
    %120 = vmatpush.msra.mxu0 0.0
    %121 = vmatpush.msra.mxu0 0.0
    %122 = vmatpush.msra.mxu0 0.0
    %123 = vmatpush.msra.mxu0 0.0
    %124 = vmatpush.msra.mxu0 %v91
    %125 = vmatmul.f32.gmra.mxu0 %v107
    %v126 = vpop.f32.mrf.mxu0
    %v127 = vadd.f32 %v97, %v126
    %128 = vdwg.mxu0
    %129 = vmatpush.msra.mxu0 0.0
    %130 = vmatpush.msra.mxu0 0.0
    %131 = vmatpush.msra.mxu0 0.0
    %132 = vmatpush.msra.mxu0 0.0
    %133 = vmatpush.msra.mxu0 0.0
    %134 = vmatpush.msra.mxu0 0.0
    %135 = vmatpush.msra.mxu0 0.0
    %136 = vmatpush.msra.mxu0 0.0
    %137 = vmatpush.msra.mxu0 0.0
    %138 = vmatpush.msra.mxu0 0.0
    %139 = vmatpush.msra.mxu0 0.0
    %140 = vmatpush.msra.mxu0 0.0
    %141 = vmatpush.msra.mxu0 0.0
    %142 = vmatpush.msra.mxu0 0.0
    %143 = vmatpush.msra.mxu0 0.0
    %144 = vmatpush.msra.mxu0 %v92
    %145 = vmatmul.f32.gmra.mxu0 %v107
    %v146 = vpop.f32.mrf.mxu0
    %v147 = vadd.f32 %v98, %v146
    %148 = vdwg.mxu0
    %149 = vmatpush.msra.mxu0 0.0
    %150 = vmatpush.msra.mxu0 0.0
    %151 = vmatpush.msra.mxu0 0.0
    %152 = vmatpush.msra.mxu0 0.0
    %153 = vmatpush.msra.mxu0 0.0
    %154 = vmatpush.msra.mxu0 0.0
    %155 = vmatpush.msra.mxu0 0.0
    %156 = vmatpush.msra.mxu0 0.0
    %157 = vmatpush.msra.mxu0 0.0
    %158 = vmatpush.msra.mxu0 0.0
    %159 = vmatpush.msra.mxu0 0.0
    %160 = vmatpush.msra.mxu0 0.0
    %161 = vmatpush.msra.mxu0 0.0
    %162 = vmatpush.msra.mxu0 0.0
    %163 = vmatpush.msra.mxu0 0.0
    %164 = vmatpush.msra.mxu0 %v93
    %165 = vmatmul.f32.gmra.mxu0 %v107
    %v166 = vpop.f32.mrf.mxu0
    %v167 = vadd.f32 %v99, %v166
    %168 = vdwg.mxu0
    %169 = vmatpush.msra.mxu0 0.0
    %170 = vmatpush.msra.mxu0 0.0
    %171 = vmatpush.msra.mxu0 0.0
    %172 = vmatpush.msra.mxu0 0.0
    %173 = vmatpush.msra.mxu0 0.0
    %174 = vmatpush.msra.mxu0 0.0
    %175 = vmatpush.msra.mxu0 0.0
    %176 = vmatpush.msra.mxu0 0.0
    %177 = vmatpush.msra.mxu0 0.0
    %178 = vmatpush.msra.mxu0 0.0
    %179 = vmatpush.msra.mxu0 0.0
    %180 = vmatpush.msra.mxu0 0.0
    %181 = vmatpush.msra.mxu0 0.0
    %182 = vmatpush.msra.mxu0 0.0
    %183 = vmatpush.msra.mxu0 0.0
    %184 = vmatpush.msra.mxu0 %v94
    %185 = vmatmul.f32.gmra.mxu0 %v107
    %v186 = vpop.f32.mrf.mxu0
    %v187 = vadd.f32 %v100, %v186
    %188 = vdwg.mxu0
    %v189 = vmax.f32 %v127, 0.0
    %v190 = vmax.f32 %v147, 0.0
    %v191 = vmax.f32 %v167, 0.0
    %v192 = vmax.f32 %v187, 0.0
    %v193 = vld [vmem:[#allocation8] sm:$0xff]
    %v194 = vld [vmem:[#allocation8 + $0x8] sm:$0xff]
    %v195 = vld [vmem:[#allocation8 + $0x10] sm:$0xff]
    %v196 = vld [vmem:[#allocation8 + $0x18] sm:$0xff]
    %v197 = vld [vmem:[#allocation8 + $0x20] sm:$0xff]
    %v198 = vld [vmem:[#allocation8 + $0x28] sm:$0xff]
    %v199 = vld [vmem:[#allocation8 + $0x30] sm:$0xff]
    %v200 = vld [vmem:[#allocation8 + $0x38] sm:$0xff]
    %v201 = vld [vmem:[#allocation8 + $0x40] sm:$0xff]
    %v202 = vld [vmem:[#allocation8 + $0x48] sm:$0xff]
    %v203 = vld [vmem:[#allocation8 + $0x50] sm:$0xff]
    %v204 = vld [vmem:[#allocation8 + $0x58] sm:$0xff]
    %v205 = vld [vmem:[#allocation8 + $0x60] sm:$0xff]
    %v206 = vld [vmem:[#allocation8 + $0x68] sm:$0xff]
    %v207 = vld [vmem:[#allocation8 + $0x70] sm:$0xff]
    %v208 = vld [vmem:[#allocation8 + $0x78] sm:$0xff]
    %v209 = vld [vmem:[#allocation8 + $0x80] sm:$0xff]
    %v210 = vld [vmem:[#allocation8 + $0x88] sm:$0xff]
    %v211 = vld [vmem:[#allocation8 + $0x90] sm:$0xff]
    %v212 = vld [vmem:[#allocation8 + $0x98] sm:$0xff]
    %v213 = vld [vmem:[#allocation8 + $0xa0] sm:$0xff]
    %v214 = vld [vmem:[#allocation8 + $0xa8] sm:$0xff]
    %v215 = vld [vmem:[#allocation8 + $0xb0] sm:$0xff]
    %v216 = vld [vmem:[#allocation8 + $0xb8] sm:$0xff]
    %v217 = vld [vmem:[#allocation8 + $0xc0] sm:$0xff]
    %v218 = vld [vmem:[#allocation8 + $0xc8] sm:$0xff]
    %v219 = vld [vmem:[#allocation8 + $0xd0] sm:$0xff]
    %v220 = vld [vmem:[#allocation8 + $0xd8] sm:$0xff]
    %v221 = vld [vmem:[#allocation8 + $0xe0] sm:$0xff]
    %v222 = vld [vmem:[#allocation8 + $0xe8] sm:$0xff]
    %v223 = vld [vmem:[#allocation8 + $0xf0] sm:$0xff]
    %v224 = vld [vmem:[#allocation8 + $0xf8] sm:$0xff]
    %v225 = vld [vmem:[#allocation8 + $0x100] sm:$0xff]
    %v226 = vld [vmem:[#allocation8 + $0x108] sm:$0xff]
    %v227 = vld [vmem:[#allocation8 + $0x110] sm:$0xff]
    %v228 = vld [vmem:[#allocation8 + $0x118] sm:$0xff]
    %v229 = vld [vmem:[#allocation8 + $0x120] sm:$0xff]
    %v230 = vld [vmem:[#allocation8 + $0x128] sm:$0xff]
    %v231 = vld [vmem:[#allocation8 + $0x130] sm:$0xff]
    %v232 = vld [vmem:[#allocation8 + $0x138] sm:$0xff]
    %v233 = vld [vmem:[#allocation8 + $0x140] sm:$0xff]
    %v234 = vld [vmem:[#allocation8 + $0x148] sm:$0xff]
    %v235 = vld [vmem:[#allocation8 + $0x150] sm:$0xff]
    %v236 = vld [vmem:[#allocation8 + $0x158] sm:$0xff]
    %v237 = vld [vmem:[#allocation8 + $0x160] sm:$0xff]
    %v238 = vld [vmem:[#allocation8 + $0x168] sm:$0xff]
    %v239 = vld [vmem:[#allocation8 + $0x170] sm:$0xff]
    %v240 = vld [vmem:[#allocation8 + $0x178] sm:$0xff]
    %v241 = vld [vmem:[#allocation8 + $0x180] sm:$0xff]
    %v242 = vld [vmem:[#allocation8 + $0x188] sm:$0xff]
    %v243 = vld [vmem:[#allocation8 + $0x190] sm:$0xff]
    %v244 = vld [vmem:[#allocation8 + $0x198] sm:$0xff]
    %v245 = vld [vmem:[#allocation8 + $0x1a0] sm:$0xff]
    %v246 = vld [vmem:[#allocation8 + $0x1a8] sm:$0xff]
    %v247 = vld [vmem:[#allocation8 + $0x1b0] sm:$0xff]
    %v248 = vld [vmem:[#allocation8 + $0x1b8] sm:$0xff]
    %v249 = vld [vmem:[#allocation8 + $0x1c0] sm:$0xff]
    %v250 = vld [vmem:[#allocation8 + $0x1c8] sm:$0xff]
    %v251 = vld [vmem:[#allocation8 + $0x1d0] sm:$0xff]
    %v252 = vld [vmem:[#allocation8 + $0x1d8] sm:$0xff]
    %v253 = vld [vmem:[#allocation8 + $0x1e0] sm:$0xff]
    %v254 = vld [vmem:[#allocation8 + $0x1e8] sm:$0xff]
    %v255 = vld [vmem:[#allocation8 + $0x1f0] sm:$0xff]
    %v256 = vld [vmem:[#allocation8 + $0x1f8] sm:$0xff]
    %v257 = vld [vmem:[#allocation8 + $0x200] sm:$0xff]
    %v258 = vld [vmem:[#allocation8 + $0x208] sm:$0xff]
    %v259 = vld [vmem:[#allocation8 + $0x210] sm:$0xff]
    %v260 = vld [vmem:[#allocation8 + $0x218] sm:$0xff]
    %v261 = vld [vmem:[#allocation8 + $0x220] sm:$0xff]
    %v262 = vld [vmem:[#allocation8 + $0x228] sm:$0xff]
    %v263 = vld [vmem:[#allocation8 + $0x230] sm:$0xff]
    %v264 = vld [vmem:[#allocation8 + $0x238] sm:$0xff]
    %v265 = vld [vmem:[#allocation8 + $0x240] sm:$0xff]
    %v266 = vld [vmem:[#allocation8 + $0x248] sm:$0xff]
    %v267 = vld [vmem:[#allocation8 + $0x250] sm:$0xff]
    %v268 = vld [vmem:[#allocation8 + $0x258] sm:$0xff]
    %v269 = vld [vmem:[#allocation8 + $0x260] sm:$0xff]
    %v270 = vld [vmem:[#allocation8 + $0x268] sm:$0xff]
    %v271 = vld [vmem:[#allocation8 + $0x270] sm:$0xff]
    %v272 = vld [vmem:[#allocation8 + $0x278] sm:$0xff]
    %v273 = vld [vmem:[#allocation8 + $0x280] sm:$0xff]
    %v274 = vld [vmem:[#allocation8 + $0x288] sm:$0xff]
    %v275 = vld [vmem:[#allocation8 + $0x290] sm:$0xff]
    %v276 = vld [vmem:[#allocation8 + $0x298] sm:$0xff]
    %v277 = vld [vmem:[#allocation8 + $0x2a0] sm:$0xff]
    %v278 = vld [vmem:[#allocation8 + $0x2a8] sm:$0xff]
    %v279 = vld [vmem:[#allocation8 + $0x2b0] sm:$0xff]
    %v280 = vld [vmem:[#allocation8 + $0x2b8] sm:$0xff]
    %v281 = vld [vmem:[#allocation8 + $0x2c0] sm:$0xff]
    %v282 = vld [vmem:[#allocation8 + $0x2c8] sm:$0xff]
    %v283 = vld [vmem:[#allocation8 + $0x2d0] sm:$0xff]
    %v284 = vld [vmem:[#allocation8 + $0x2d8] sm:$0xff]
    %v285 = vld [vmem:[#allocation8 + $0x2e0] sm:$0xff]
    %v286 = vld [vmem:[#allocation8 + $0x2e8] sm:$0xff]
    %v287 = vld [vmem:[#allocation8 + $0x2f0] sm:$0xff]
    %v288 = vld [vmem:[#allocation8 + $0x2f8] sm:$0xff]
    %v289 = vld [vmem:[#allocation8 + $0x300] sm:$0xff]
    %v290 = vld [vmem:[#allocation8 + $0x308] sm:$0xff]
    %v291 = vld [vmem:[#allocation8 + $0x310] sm:$0xff]
    %v292 = vld [vmem:[#allocation8 + $0x318] sm:$0xff]
    %v293 = vld [vmem:[#allocation8 + $0x320] sm:$0xff]
    %v294 = vld [vmem:[#allocation8 + $0x328] sm:$0xff]
    %v295 = vld [vmem:[#allocation8 + $0x330] sm:$0xff]
    %v296 = vld [vmem:[#allocation8 + $0x338] sm:$0xff]
    %v297 = vld [vmem:[#allocation8 + $0x340] sm:$0xff]
    %v298 = vld [vmem:[#allocation8 + $0x348] sm:$0xff]
    %v299 = vld [vmem:[#allocation8 + $0x350] sm:$0xff]
    %v300 = vld [vmem:[#allocation8 + $0x358] sm:$0xff]
    %v301 = vld [vmem:[#allocation8 + $0x360] sm:$0xff]
    %v302 = vld [vmem:[#allocation8 + $0x368] sm:$0xff]
    %v303 = vld [vmem:[#allocation8 + $0x370] sm:$0xff]
    %v304 = vld [vmem:[#allocation8 + $0x378] sm:$0xff]
    %v305 = vld [vmem:[#allocation8 + $0x380] sm:$0xff]
    %v306 = vld [vmem:[#allocation8 + $0x388] sm:$0xff]
    %v307 = vld [vmem:[#allocation8 + $0x390] sm:$0xff]
    %v308 = vld [vmem:[#allocation8 + $0x398] sm:$0xff]
    %v309 = vld [vmem:[#allocation8 + $0x3a0] sm:$0xff]
    %v310 = vld [vmem:[#allocation8 + $0x3a8] sm:$0xff]
    %v311 = vld [vmem:[#allocation8 + $0x3b0] sm:$0xff]
    %v312 = vld [vmem:[#allocation8 + $0x3b8] sm:$0xff]
    %v313 = vld [vmem:[#allocation8 + $0x3c0] sm:$0xff]
    %v314 = vld [vmem:[#allocation8 + $0x3c8] sm:$0xff]
    %v315 = vld [vmem:[#allocation8 + $0x3d0] sm:$0xff]
    %v316 = vld [vmem:[#allocation8 + $0x3d8] sm:$0xff]
    %v317 = vld [vmem:[#allocation8 + $0x3e0] sm:$0xff]
    %v318 = vld [vmem:[#allocation8 + $0x3e8] sm:$0xff]
    %v319 = vld [vmem:[#allocation8 + $0x3f0] sm:$0xff]
    %v320 = vld [vmem:[#allocation8 + $0x3f8] sm:$0xff]
    %v321 = vld [vmem:[%s5] sm:$0x3]
    %v323 = vperm.slane %v321, 0
    %v324 = vperm.slane %v321, 1
    %327 = vmatpush.msra.mxu0 %v223
    %328 = vmatpush.msra.mxu0 %v221
    %329 = vmatpush.msra.mxu0 %v219
    %330 = vmatpush.msra.mxu0 %v217
    %331 = vmatpush.msra.mxu0 %v215
    %332 = vmatpush.msra.mxu0 %v213
    %333 = vmatpush.msra.mxu0 %v211
    %334 = vmatpush.msra.mxu0 %v209
    %335 = vmatpush.msra.mxu0 %v207
    %336 = vmatpush.msra.mxu0 %v205
    %337 = vmatpush.msra.mxu0 %v203
    %338 = vmatpush.msra.mxu0 %v201
    %339 = vmatpush.msra.mxu0 %v199
    %340 = vmatpush.msra.mxu0 %v197
    %341 = vmatpush.msra.mxu0 %v195
    %342 = vmatpush.msra.mxu0 %v193
    %343 = vmatmul.f32.gmra.mxu0 %v189
    %v344 = vpop.f32.mrf.mxu0
    %v345 = vadd.f32 %v323, %v344
    %346 = vdwg.mxu0
    %347 = vmatpush.msra.mxu0 %v255
    %348 = vmatpush.msra.mxu0 %v253
    %349 = vmatpush.msra.mxu0 %v251
    %350 = vmatpush.msra.mxu0 %v249
    %351 = vmatpush.msra.mxu0 %v247
    %352 = vmatpush.msra.mxu0 %v245
    %353 = vmatpush.msra.mxu0 %v243
    %354 = vmatpush.msra.mxu0 %v241
    %355 = vmatpush.msra.mxu0 %v239
    %356 = vmatpush.msra.mxu0 %v237
    %357 = vmatpush.msra.mxu0 %v235
    %358 = vmatpush.msra.mxu0 %v233
    %359 = vmatpush.msra.mxu0 %v231
    %360 = vmatpush.msra.mxu0 %v229
    %361 = vmatpush.msra.mxu0 %v227
    %362 = vmatpush.msra.mxu0 %v225
    %363 = vmatmul.f32.gmra.mxu0 %v190
    %v364 = vpop.f32.mrf.mxu0
    %v365 = vadd.f32 %v345, %v364
    %366 = vdwg.mxu0
    %367 = vmatpush.msra.mxu0 %v287
    %368 = vmatpush.msra.mxu0 %v285
    %369 = vmatpush.msra.mxu0 %v283
    %370 = vmatpush.msra.mxu0 %v281
    %371 = vmatpush.msra.mxu0 %v279
    %372 = vmatpush.msra.mxu0 %v277
    %373 = vmatpush.msra.mxu0 %v275
    %374 = vmatpush.msra.mxu0 %v273
    %375 = vmatpush.msra.mxu0 %v271
    %376 = vmatpush.msra.mxu0 %v269
    %377 = vmatpush.msra.mxu0 %v267
    %378 = vmatpush.msra.mxu0 %v265
    %379 = vmatpush.msra.mxu0 %v263
    %380 = vmatpush.msra.mxu0 %v261
    %381 = vmatpush.msra.mxu0 %v259
    %382 = vmatpush.msra.mxu0 %v257
    %383 = vmatmul.f32.gmra.mxu0 %v191
    %v384 = vpop.f32.mrf.mxu0
    %v385 = vadd.f32 %v365, %v384
    %386 = vdwg.mxu0
    %387 = vmatpush.msra.mxu0 %v319
    %388 = vmatpush.msra.mxu0 %v317
    %389 = vmatpush.msra.mxu0 %v315
    %390 = vmatpush.msra.mxu0 %v313
    %391 = vmatpush.msra.mxu0 %v311
    %392 = vmatpush.msra.mxu0 %v309
    %393 = vmatpush.msra.mxu0 %v307
    %394 = vmatpush.msra.mxu0 %v305
    %395 = vmatpush.msra.mxu0 %v303
    %396 = vmatpush.msra.mxu0 %v301
    %397 = vmatpush.msra.mxu0 %v299
    %398 = vmatpush.msra.mxu0 %v297
    %399 = vmatpush.msra.mxu0 %v295
    %400 = vmatpush.msra.mxu0 %v293
    %401 = vmatpush.msra.mxu0 %v291
    %402 = vmatpush.msra.mxu0 %v289
    %403 = vmatmul.f32.gmra.mxu0 %v192
    %v404 = vpop.f32.mrf.mxu0
    %v405 = vadd.f32 %v385, %v404
    %406 = vdwg.mxu0
    %407 = vmatpush.msra.mxu0 %v224
    %408 = vmatpush.msra.mxu0 %v222
    %409 = vmatpush.msra.mxu0 %v220
    %410 = vmatpush.msra.mxu0 %v218
    %411 = vmatpush.msra.mxu0 %v216
    %412 = vmatpush.msra.mxu0 %v214
    %413 = vmatpush.msra.mxu0 %v212
    %414 = vmatpush.msra.mxu0 %v210
    %415 = vmatpush.msra.mxu0 %v208
    %416 = vmatpush.msra.mxu0 %v206
    %417 = vmatpush.msra.mxu0 %v204
    %418 = vmatpush.msra.mxu0 %v202
    %419 = vmatpush.msra.mxu0 %v200
    %420 = vmatpush.msra.mxu0 %v198
    %421 = vmatpush.msra.mxu0 %v196
    %422 = vmatpush.msra.mxu0 %v194
    %423 = vmatmul.f32.gmra.mxu0 %v189
    %v424 = vpop.f32.mrf.mxu0
    %v425 = vadd.f32 %v324, %v424
    %426 = vdwg.mxu0
    %427 = vmatpush.msra.mxu0 %v256
    %428 = vmatpush.msra.mxu0 %v254
    %429 = vmatpush.msra.mxu0 %v252
    %430 = vmatpush.msra.mxu0 %v250
    %431 = vmatpush.msra.mxu0 %v248
    %432 = vmatpush.msra.mxu0 %v246
    %433 = vmatpush.msra.mxu0 %v244
    %434 = vmatpush.msra.mxu0 %v242
    %435 = vmatpush.msra.mxu0 %v240
    %436 = vmatpush.msra.mxu0 %v238
    %437 = vmatpush.msra.mxu0 %v236
    %438 = vmatpush.msra.mxu0 %v234
    %439 = vmatpush.msra.mxu0 %v232
    %440 = vmatpush.msra.mxu0 %v230
    %441 = vmatpush.msra.mxu0 %v228
    %442 = vmatpush.msra.mxu0 %v226
    %443 = vmatmul.f32.gmra.mxu0 %v190
    %v444 = vpop.f32.mrf.mxu0
    %v445 = vadd.f32 %v425, %v444
    %446 = vdwg.mxu0
    %447 = vmatpush.msra.mxu0 %v288
    %448 = vmatpush.msra.mxu0 %v286
    %449 = vmatpush.msra.mxu0 %v284
    %450 = vmatpush.msra.mxu0 %v282
    %451 = vmatpush.msra.mxu0 %v280
    %452 = vmatpush.msra.mxu0 %v278
    %453 = vmatpush.msra.mxu0 %v276
    %454 = vmatpush.msra.mxu0 %v274
    %455 = vmatpush.msra.mxu0 %v272
    %456 = vmatpush.msra.mxu0 %v270
    %457 = vmatpush.msra.mxu0 %v268
    %458 = vmatpush.msra.mxu0 %v266
    %459 = vmatpush.msra.mxu0 %v264
    %460 = vmatpush.msra.mxu0 %v262
    %461 = vmatpush.msra.mxu0 %v260
    %462 = vmatpush.msra.mxu0 %v258
    %463 = vmatmul.f32.gmra.mxu0 %v191
    %v464 = vpop.f32.mrf.mxu0
    %v465 = vadd.f32 %v445, %v464
    %466 = vdwg.mxu0
    %467 = vmatpush.msra.mxu0 %v320
    %468 = vmatpush.msra.mxu0 %v318
    %469 = vmatpush.msra.mxu0 %v316
    %470 = vmatpush.msra.mxu0 %v314
    %471 = vmatpush.msra.mxu0 %v312
    %472 = vmatpush.msra.mxu0 %v310
    %473 = vmatpush.msra.mxu0 %v308
    %474 = vmatpush.msra.mxu0 %v306
    %475 = vmatpush.msra.mxu0 %v304
    %476 = vmatpush.msra.mxu0 %v302
    %477 = vmatpush.msra.mxu0 %v300
    %478 = vmatpush.msra.mxu0 %v298
    %479 = vmatpush.msra.mxu0 %v296
    %480 = vmatpush.msra.mxu0 %v294
    %481 = vmatpush.msra.mxu0 %v292
    %482 = vmatpush.msra.mxu0 %v290
    %483 = vmatmul.f32.gmra.mxu0 %v192
    %v484 = vpop.f32.mrf.mxu0
    %v485 = vadd.f32 %v465, %v484
    %486 = vdwg.mxu0
    %v487 = vmax.f32 %v405, 0.0
    %v488 = vmax.f32 %v485, 0.0
    %v489 = vld [vmem:[#allocation9] sm:$0xff]
    %v490 = vld [vmem:[#allocation9 + $0x8] sm:$0xff]
    %v491 = vld [vmem:[#allocation9 + $0x10] sm:$0xff]
    %v492 = vld [vmem:[#allocation9 + $0x18] sm:$0xff]
    %v493 = vld [vmem:[#allocation9 + $0x20] sm:$0xff]
    %v494 = vld [vmem:[#allocation9 + $0x28] sm:$0xff]
    %v495 = vld [vmem:[#allocation9 + $0x30] sm:$0xff]
    %v496 = vld [vmem:[#allocation9 + $0x38] sm:$0xff]
    %v497 = vld [vmem:[#allocation9 + $0x40] sm:$0xff]
    %v498 = vld [vmem:[#allocation9 + $0x48] sm:$0xff]
    %v499 = vld [vmem:[#allocation9 + $0x50] sm:$0xff]
    %v500 = vld [vmem:[#allocation9 + $0x58] sm:$0xff]
    %v501 = vld [vmem:[#allocation9 + $0x60] sm:$0xff]
    %v502 = vld [vmem:[#allocation9 + $0x68] sm:$0xff]
    %v503 = vld [vmem:[#allocation9 + $0x70] sm:$0xff]
    %v504 = vld [vmem:[#allocation9 + $0x78] sm:$0xff]
    %v505 = vld [vmem:[#allocation9 + $0x80] sm:$0xff]
    %v506 = vld [vmem:[#allocation9 + $0x88] sm:$0xff]
    %v507 = vld [vmem:[#allocation9 + $0x90] sm:$0xff]
    %v508 = vld [vmem:[#allocation9 + $0x98] sm:$0xff]
    %v509 = vld [vmem:[#allocation9 + $0xa0] sm:$0xff]
    %v510 = vld [vmem:[#allocation9 + $0xa8] sm:$0xff]
    %v511 = vld [vmem:[#allocation9 + $0xb0] sm:$0xff]
    %v512 = vld [vmem:[#allocation9 + $0xb8] sm:$0xff]
    %v513 = vld [vmem:[#allocation9 + $0xc0] sm:$0xff]
    %v514 = vld [vmem:[#allocation9 + $0xc8] sm:$0xff]
    %v515 = vld [vmem:[#allocation9 + $0xd0] sm:$0xff]
    %v516 = vld [vmem:[#allocation9 + $0xd8] sm:$0xff]
    %v517 = vld [vmem:[#allocation9 + $0xe0] sm:$0xff]
    %v518 = vld [vmem:[#allocation9 + $0xe8] sm:$0xff]
    %v519 = vld [vmem:[#allocation9 + $0xf0] sm:$0xff]
    %v520 = vld [vmem:[#allocation9 + $0xf8] sm:$0xff]
    %s521 = sld [smem:[#allocation2]]
    %v522 = vld [vmem:[%s7] sm:$0x1]
    %v524 = vperm.slane %v522, 0
    %526 = vmatpush.msra.mxu0 %v504
    %527 = vmatpush.msra.mxu0 %v503
    %528 = vmatpush.msra.mxu0 %v502
    %529 = vmatpush.msra.mxu0 %v501
    %530 = vmatpush.msra.mxu0 %v500
    %531 = vmatpush.msra.mxu0 %v499
    %532 = vmatpush.msra.mxu0 %v498
    %533 = vmatpush.msra.mxu0 %v497
    %534 = vmatpush.msra.mxu0 %v496
    %535 = vmatpush.msra.mxu0 %v495
    %536 = vmatpush.msra.mxu0 %v494
    %537 = vmatpush.msra.mxu0 %v493
    %538 = vmatpush.msra.mxu0 %v492
    %539 = vmatpush.msra.mxu0 %v491
    %540 = vmatpush.msra.mxu0 %v490
    %541 = vmatpush.msra.mxu0 %v489
    %542 = vmatmul.f32.gmra.mxu0 %v487
    %v543 = vpop.f32.mrf.mxu0
    %v544 = vadd.f32 %v524, %v543
    %545 = vdwg.mxu0
    %546 = vmatpush.msra.mxu0 %v520
    %547 = vmatpush.msra.mxu0 %v519
    %548 = vmatpush.msra.mxu0 %v518
    %549 = vmatpush.msra.mxu0 %v517
    %550 = vmatpush.msra.mxu0 %v516
    %551 = vmatpush.msra.mxu0 %v515
    %552 = vmatpush.msra.mxu0 %v514
    %553 = vmatpush.msra.mxu0 %v513
    %554 = vmatpush.msra.mxu0 %v512
    %555 = vmatpush.msra.mxu0 %v511
    %556 = vmatpush.msra.mxu0 %v510
    %557 = vmatpush.msra.mxu0 %v509
    %558 = vmatpush.msra.mxu0 %v508
    %559 = vmatpush.msra.mxu0 %v507
    %560 = vmatpush.msra.mxu0 %v506
    %561 = vmatpush.msra.mxu0 %v505
    %562 = vmatmul.f32.gmra.mxu0 %v488
    %v563 = vpop.f32.mrf.mxu0
    %v564 = vadd.f32 %v544, %v563
    %565 = vdwg.mxu0
    %v566 = vtanh.pop %v564
    %v567 = vstv %s521
    %v568 = vmul.f32 %v566, %v567
    %569 = vst [vmem:[#allocation11] sm:$0x3] %v568
    // Predicated region
    $region50: #{tpu_custom_call.1} parent=1 // pred_check
      _
    $region51: #{tpu_custom_call.1} parent=1 // pred_check_branch
      %571 = sbr.rel (0) target = $region53
    $region52: #{tpu_custom_call.1} parent=1 // pred_region
      %573 = vsyncadd [#allocation5], 0
      %s575 = sshll.u32 [#allocation11], 4
      %s576 = int_to_ptr.vmem [resolvable:$true] %s575
      %s577 = sshll.u32 %s8, 4
      %s578 = int_to_ptr.hbm [resolvable:$true] %s577
      %580 = dma.vmem_to_hbm [thread:$0]  %s576, 32, %s578, [#allocation5]
    $region53: #{tpu_custom_call.1} parent=1 // pred_fallthru
      _
    // Predicated region
    $region54: #{tpu_custom_call.1} parent=1 // pred_check
      _
    $region55: #{tpu_custom_call.1} parent=1 // pred_check_branch
      %582 = sbr.rel (0) target = $region57
    $region56: #{tpu_custom_call.1} parent=1 // pred_region
      %584 = dma.done [#allocation5], 32
    $region57: #{tpu_custom_call.1} parent=1 // pred_fallthru
      _
    %585 = vsyncpa [#allocation4], 1
    %586 = vsyncpa [#allocation7], 1
    %587 = vsyncpa [#allocation10], 1
    %588 = vsyncpa [#allocation5], 1

</llo_original>
